<compile_context>
chip_gen: v7x
topology: tpu7x:2x2x1
jax: 0.10.0
libtpu: 0.0.40
codegen_flags: <defaults>
</compile_context>

<pallas_src>
import functools

import jax
import jax.numpy as jnp
from jax import lax
from jax.experimental import pallas as pl
from jax.experimental.pallas import tpu as pltpu

_EPS = 1e-5
_LANE = 128
_VMEM_LIMIT = 32 * 1024 * 1024


def _round_up(x, m):
    return (x + m - 1) // m * m


# ----------------------------- Pallas kernels ------------------------------ #

def _matmul_stats_kernel(p_ref, w_ref, y_ref, sum_ref, ssq_ref):
    """bf16 MXU matmul tile (f32 accum) + per-channel sum / sumsq accumulation."""
    @pl.when(pl.program_id(0) == 0)
    def _():
        sum_ref[...] = jnp.zeros_like(sum_ref)
        ssq_ref[...] = jnp.zeros_like(ssq_ref)

    y = jnp.dot(p_ref[...], w_ref[...], preferred_element_type=jnp.float32)
    y_ref[...] = y
    sum_ref[...] += jnp.sum(y, axis=0, keepdims=True)
    ssq_ref[...] += jnp.sum(y * y, axis=0, keepdims=True)


def _bn_act_kernel(y_ref, s_ref, b_ref, o_ref, *, relu):
    out = y_ref[...] * s_ref[...] + b_ref[...]
    if relu:
        out = jnp.maximum(out, 0.0)
    o_ref[...] = out.astype(o_ref.dtype)


def _bn_add_bn_relu_kernel(y_ref, s_ref, b_ref, r_ref, rs_ref, rb_ref, o_ref):
    out = y_ref[...] * s_ref[...] + b_ref[...]          # bn2(conv2)
    res = r_ref[...] * rs_ref[...] + rb_ref[...]        # shortcut BN (or identity)
    o_ref[...] = jnp.maximum(out + res, 0.0).astype(o_ref.dtype)


# ---------------------------- pallas_call wrappers -------------------------- #

def _conv_matmul_stats(patches_bf16, w_bf16, tm):
    """Tiled conv-as-matmul: returns f32 conv output + per-channel sum / sumsq."""
    Mp, Kp = patches_bf16.shape
    Cp = w_bf16.shape[1]
    cost = pl.CostEstimate(
        flops=2 * Mp * Kp * Cp,
        transcendentals=0,
        bytes_accessed=Mp * Kp * 2 + Kp * Cp * 2 + Mp * Cp * 4 + 2 * Cp * 4)
    return pl.pallas_call(
        _matmul_stats_kernel,
        out_shape=(jax.ShapeDtypeStruct((Mp, Cp), jnp.float32),
                   jax.ShapeDtypeStruct((1, Cp), jnp.float32),
                   jax.ShapeDtypeStruct((1, Cp), jnp.float32)),
        grid=(Mp // tm,),
        in_specs=[pl.BlockSpec((tm, Kp), lambda i: (i, 0)),
                  pl.BlockSpec((Kp, Cp), lambda i: (0, 0))],   # resident weight
        out_specs=(pl.BlockSpec((tm, Cp), lambda i: (i, 0)),
                   pl.BlockSpec((1, Cp), lambda i: (0, 0)),    # resident accumulators
                   pl.BlockSpec((1, Cp), lambda i: (0, 0))),
        compiler_params=pltpu.CompilerParams(
            dimension_semantics=("arbitrary",),                # stats reduction over M
            vmem_limit_bytes=_VMEM_LIMIT),
        cost_estimate=cost,
    )(patches_bf16, w_bf16)


def _bn_act(y, scale, shift, tm, *, relu):
    Mp, Cp = y.shape
    kern = functools.partial(_bn_act_kernel, relu=relu)
    return pl.pallas_call(
        kern,
        out_shape=jax.ShapeDtypeStruct((Mp, Cp), jnp.float32),
        grid=(Mp // tm,),
        in_specs=[pl.BlockSpec((tm, Cp), lambda i: (i, 0)),
                  pl.BlockSpec((1, Cp), lambda i: (0, 0)),
                  pl.BlockSpec((1, Cp), lambda i: (0, 0))],
        out_specs=pl.BlockSpec((tm, Cp), lambda i: (i, 0)),
        compiler_params=pltpu.CompilerParams(
            dimension_semantics=("parallel",),
            vmem_limit_bytes=_VMEM_LIMIT),
        cost_estimate=pl.CostEstimate(flops=3 * Mp * Cp, transcendentals=0,
                                      bytes_accessed=2 * Mp * Cp * 4),
    )(y, scale, shift)


def _bn_add_bn_relu(y, scale, shift, res, rscale, rshift, tm):
    Mp, Cp = y.shape
    return pl.pallas_call(
        _bn_add_bn_relu_kernel,
        out_shape=jax.ShapeDtypeStruct((Mp, Cp), jnp.float32),
        grid=(Mp // tm,),
        in_specs=[pl.BlockSpec((tm, Cp), lambda i: (i, 0)),
                  pl.BlockSpec((1, Cp), lambda i: (0, 0)),
                  pl.BlockSpec((1, Cp), lambda i: (0, 0)),
                  pl.BlockSpec((tm, Cp), lambda i: (i, 0)),
                  pl.BlockSpec((1, Cp), lambda i: (0, 0)),
                  pl.BlockSpec((1, Cp), lambda i: (0, 0))],
        out_specs=pl.BlockSpec((tm, Cp), lambda i: (i, 0)),
        compiler_params=pltpu.CompilerParams(
            dimension_semantics=("parallel",),
            vmem_limit_bytes=_VMEM_LIMIT),
        cost_estimate=pl.CostEstimate(flops=6 * Mp * Cp, transcendentals=0,
                                      bytes_accessed=3 * Mp * Cp * 4),
    )(y, scale, shift, res, rscale, rshift)


# ------------------------------ JAX glue ----------------------------------- #

def _im2col(x_nhwc, kh, kw, stride, pad):
    # TODO(synk): build patches in-kernel (halo DMA + static shifts) instead of
    # materializing the kh*kw-expanded patch matrix in HBM.
    x = jnp.pad(x_nhwc, ((0, 0), (pad, pad), (pad, pad), (0, 0)))
    N, Hp, Wp, C = x.shape
    Ho = (Hp - kh) // stride + 1
    Wo = (Wp - kw) // stride + 1
    cols = []
    for di in range(kh):
        for dj in range(kw):
            cols.append(
                x[:, di:di + stride * Ho:stride, dj:dj + stride * Wo:stride, :])
    patches = jnp.concatenate(cols, axis=-1)          # (N, Ho, Wo, kh*kw*C)
    return patches.reshape(N * Ho * Wo, kh * kw * C), (N, Ho, Wo)


def _w_to_mat(w_oihw):
    # (Cout, Cin, kh, kw) -> (kh*kw*Cin, Cout), matching the (di, dj, cin) order.
    cout = w_oihw.shape[0]
    return jnp.transpose(w_oihw, (2, 3, 1, 0)).reshape(-1, cout)


def _pad2(a, rows, cols):
    return jnp.pad(a, ((0, rows - a.shape[0]), (0, cols - a.shape[1])))


def _pad_vec(v, cols):
    return jnp.pad(v, (0, cols - v.shape[0]))[None, :]


def _bn_scale_shift(ssum, ssq, m_real, gamma_p, beta_p):
    # Batch-norm (training mode, biased var) folded into one FMA: y*scale+shift.
    mean = ssum / m_real
    var = jnp.maximum(ssq / m_real - mean * mean, 0.0)
    scale = gamma_p * lax.rsqrt(var + _EPS)
    shift = beta_p - mean * scale
    return scale, shift


def basic_block_forward(x_nchw, params, stride, *, tm=256):
    x = jnp.transpose(x_nchw, (0, 2, 3, 1)).astype(jnp.float32)   # NCHW -> NHWC
    N, H, W, Cin = x.shape
    Cmid = params["w1"].shape[0]
    Cp = _round_up(Cmid, _LANE)

    # ---- conv1 (3x3, stride, pad 1) + bn1 + relu ----
    p1, (_, Ho, Wo) = _im2col(x, 3, 3, stride, 1)
    M = N * Ho * Wo
    tm_eff = min(tm, _round_up(M, 8))
    Mp = _round_up(M, tm_eff)
    K1p = _round_up(p1.shape[1], _LANE)

    p1p = _pad2(p1, Mp, K1p).astype(jnp.bfloat16)
    w1 = _pad2(_w_to_mat(params["w1"]), K1p, Cp).astype(jnp.bfloat16)
    y1, s1, q1 = _conv_matmul_stats(p1p, w1, tm_eff)
    sc1, sh1 = _bn_scale_shift(s1, q1, M, _pad_vec(params["g1"], Cp),
                               _pad_vec(params["b1"], Cp))
    out1 = _bn_act(y1, sc1, sh1, tm_eff, relu=True)

    # ---- shortcut branch (1x1 conv + bn, or identity) ----
    if stride != 1 or Cin != Cmid:
        xs = x[:, ::stride, ::stride, :].reshape(M, Cin)
        Ksp = _round_up(Cin, _LANE)
        ps = _pad2(xs, Mp, Ksp).astype(jnp.bfloat16)
        ws = _pad2(jnp.transpose(params["ws"].reshape(Cmid, Cin)),
                   Ksp, Cp).astype(jnp.bfloat16)
        res, ss, qs = _conv_matmul_stats(ps, ws, tm_eff)
        rsc, rsh = _bn_scale_shift(ss, qs, M, _pad_vec(params["gs"], Cp),
                                   _pad_vec(params["bs"], Cp))
    else:
        res = _pad2(x.reshape(M, Cin), Mp, Cp)
        rsc = _pad_vec(jnp.ones((Cmid,), jnp.float32), Cp)
        rsh = jnp.zeros((1, Cp), jnp.float32)

    # ---- conv2 (3x3, stride 1, pad 1) + bn2 + shortcut-bn + add + relu ----
    out1_nhwc = out1[:M, :Cmid].reshape(N, Ho, Wo, Cmid)
    p2, _ = _im2col(out1_nhwc, 3, 3, 1, 1)
    K2p = _round_up(p2.shape[1], _LANE)
    p2p = _pad2(p2, Mp, K2p).astype(jnp.bfloat16)
    w2 = _pad2(_w_to_mat(params["w2"]), K2p, Cp).astype(jnp.bfloat16)
    y2, s2, q2 = _conv_matmul_stats(p2p, w2, tm_eff)
    sc2, sh2 = _bn_scale_shift(s2, q2, M, _pad_vec(params["g2"], Cp),
                               _pad_vec(params["b2"], Cp))
    out2 = _bn_add_bn_relu(y2, sc2, sh2, res, rsc, rsh, tm_eff)

    out_nhwc = out2[:M, :Cmid].reshape(N, Ho, Wo, Cmid)
    return jnp.transpose(out_nhwc, (0, 3, 1, 2))      # NHWC -> NCHW


# --------------------------- pure-JAX reference ----------------------------- #

def _reference_forward(x_nchw, params, stride):
    x = jnp.transpose(x_nchw, (0, 2, 3, 1)).astype(jnp.float32)
    N, H, W, Cin = x.shape
    Cmid = params["w1"].shape[0]

    def bn(y, g, b):
        mean = y.mean(axis=0, keepdims=True)
        var = ((y - mean) ** 2).mean(axis=0, keepdims=True)
        return (y - mean) * lax.rsqrt(var + _EPS) * g[None, :] + b[None, :]

    p1, (_, Ho, Wo) = _im2col(x, 3, 3, stride, 1)
    o1 = jnp.maximum(bn(p1 @ _w_to_mat(params["w1"]),
                        params["g1"], params["b1"]), 0.0)
    if stride != 1 or Cin != Cmid:
        xs = x[:, ::stride, ::stride, :].reshape(-1, Cin)
        res = bn(xs @ jnp.transpose(params["ws"].reshape(Cmid, Cin)),
                 params["gs"], params["bs"])
    else:
        res = x.reshape(-1, Cin)
    p2, _ = _im2col(o1.reshape(N, Ho, Wo, Cmid), 3, 3, 1, 1)
    o2 = bn(p2 @ _w_to_mat(params["w2"]), params["g2"], params["b2"])
    out = jnp.maximum(o2 + res, 0.0).reshape(N, Ho, Wo, Cmid)
    return jnp.transpose(out, (0, 3, 1, 2))


# -------------------------------- params ------------------------------------ #

def init_params(key, in_planes, planes):
    k1, k2, k3 = jax.random.split(key, 3)

    def conv_init(k, shape):
        fan_in = shape[1] * shape[2] * shape[3]
        return jax.random.normal(k, shape, jnp.float32) * (2.0 / fan_in) ** 0.5

    return {
        "w1": conv_init(k1, (planes, in_planes, 3, 3)),
        "g1": jnp.ones((planes,), jnp.float32),
        "b1": jnp.zeros((planes,), jnp.float32),
        "w2": conv_init(k2, (planes, planes, 3, 3)),
        "g2": jnp.ones((planes,), jnp.float32),
        "b2": jnp.zeros((planes,), jnp.float32),
        # 1x1 shortcut conv + bn (used because stride != 1 / in_planes != planes)
        "ws": conv_init(k3, (planes, in_planes, 1, 1)),
        "gs": jnp.ones((planes,), jnp.float32),
        "bs": jnp.zeros((planes,), jnp.float32),
    }


# TODO(synk): BatchNorm running_mean/running_var (momentum) buffer updates are
# training-only state mutation and are not materialized in this forward pass.

if __name__ == "__main__":
    key = jax.random.PRNGKey(0)
    kx, kp = jax.random.split(key)

    in_planes, planes, stride = 4, 8, 2
    x = jax.random.normal(kx, (2, in_planes, 16, 16), jnp.float32)  # NCHW input
    params = init_params(kp, in_planes, planes)

    # tm=64 at this toy size exercises a multi-step grid (M=128 -> 2 row tiles).
    fwd = jax.jit(functools.partial(basic_block_forward, stride=stride, tm=64))
    out = jax.block_until_ready(fwd(x, params))

    assert out.shape == (2, planes, 8, 8), out.shape
    assert bool(jnp.all(out >= 0.0))  # final ReLU

    # Relaxed check vs. f32 reference (bf16 MXU operands introduce small drift).
    ref = _reference_forward(x, params, stride)
    rel_err = float(jnp.max(jnp.abs(out - ref)) / (jnp.max(jnp.abs(ref)) + 1e-6))
    assert rel_err < 0.1, rel_err

    print("KERNEL_OK")
</pallas_src>

<mosaic_0001>
module attributes {stable_mosaic.version = 11 : i64} {
  func.func @_matmul_stats_kernel(%arg0: i32, %arg1: memref<64x128xbf16, #tpu.memory_space<vmem>>, %arg2: memref<128x128xbf16, #tpu.memory_space<vmem>>, %arg3: memref<64x128xf32, #tpu.memory_space<vmem>>, %arg4: memref<1x128xf32, #tpu.memory_space<vmem>>, %arg5: memref<1x128xf32, #tpu.memory_space<vmem>>) attributes {dimension_semantics = [#tpu.dimension_semantics<arbitrary>], iteration_bounds = array<i64: 2>, scalar_prefetch = 0 : i64, scratch_operands = 0 : i64, tpu.core_type = #tpu.core_type<tc>, window_params = [{transform_indices = @transform_0, window_bounds = array<i64: 64, 128>}, {pipeline_mode = #tpu.pipeline_mode<synchronous>, transform_indices = @transform_1, window_bounds = array<i64: 128, 128>}, {transform_indices = @transform_2, window_bounds = array<i64: 64, 128>}, {pipeline_mode = #tpu.pipeline_mode<synchronous>, transform_indices = @transform_3, window_bounds = array<i64: 1, 128>}, {pipeline_mode = #tpu.pipeline_mode<synchronous>, transform_indices = @transform_4, window_bounds = array<i64: 1, 128>}]} {
    %c0_i32 = arith.constant 0 : i32
    %0 = arith.cmpi eq, %arg0, %c0_i32 : i32
    %1 = arith.extui %0 : i1 to i32
    %c0_i32_0 = arith.constant 0 : i32
    %2 = arith.cmpi ne, %1, %c0_i32_0 : i32
    scf.if %2 {
      %cst_16 = arith.constant 0.000000e+00 : f32
      %18 = vector.broadcast %cst_16 : f32 to vector<1x128xf32>
      %c0_17 = arith.constant 0 : index
      %c0_18 = arith.constant 0 : index
      %19 = vector.load %arg4[%c0_17, %c0_18] : memref<1x128xf32, #tpu.memory_space<vmem>>, vector<1x128xf32>
      tpu.vector_store %arg4[%c0_17, %c0_18], %18 {strides = array<i32>} : memref<1x128xf32, #tpu.memory_space<vmem>>, vector<1x128xf32>,
      %cst_19 = arith.constant 0.000000e+00 : f32
      %20 = vector.broadcast %cst_19 : f32 to vector<1x128xf32>
      %c0_20 = arith.constant 0 : index
      %c0_21 = arith.constant 0 : index
      %21 = vector.load %arg5[%c0_20, %c0_21] : memref<1x128xf32, #tpu.memory_space<vmem>>, vector<1x128xf32>
      tpu.vector_store %arg5[%c0_20, %c0_21], %20 {strides = array<i32>} : memref<1x128xf32, #tpu.memory_space<vmem>>, vector<1x128xf32>,
    } else {
    }
    %c0 = arith.constant 0 : index
    %c0_1 = arith.constant 0 : index
    %3 = vector.load %arg1[%c0, %c0_1] : memref<64x128xbf16, #tpu.memory_space<vmem>>, vector<64x128xbf16>
    %c0_2 = arith.constant 0 : index
    %c0_3 = arith.constant 0 : index
    %4 = vector.load %arg2[%c0_2, %c0_3] : memref<128x128xbf16, #tpu.memory_space<vmem>>, vector<128x128xbf16>
    %cst = arith.constant dense<0.000000e+00> : vector<64x128xf32>
    %5 = tpu.matmul %3, %4, %cst {dimension_numbers = #tpu.dot_dimension_numbers<[1], [0], [0], [1], [0, 0, 1, 1], [], []>} : vector<64x128xbf16>, vector<128x128xbf16>, vector<64x128xf32> -> vector<64x128xf32>
    %c0_4 = arith.constant 0 : index
    %c0_5 = arith.constant 0 : index
    %6 = vector.load %arg3[%c0_4, %c0_5] : memref<64x128xf32, #tpu.memory_space<vmem>>, vector<64x128xf32>
    tpu.vector_store %arg3[%c0_4, %c0_5], %5 {strides = array<i32>} : memref<64x128xf32, #tpu.memory_space<vmem>>, vector<64x128xf32>,
    %c0_6 = arith.constant 0 : index
    %c0_7 = arith.constant 0 : index
    %7 = vector.load %arg4[%c0_6, %c0_7] : memref<1x128xf32, #tpu.memory_space<vmem>>, vector<1x128xf32>
    %cst_8 = arith.constant dense<0.000000e+00> : vector<128xf32>
    %8 = vector.multi_reduction <add>, %5, %cst_8 [0] : vector<64x128xf32> to vector<128xf32>
    %9 = vector.shape_cast %8 : vector<128xf32> to vector<1x128xf32>
    %10 = arith.addf %7, %9 : vector<1x128xf32>
    %c0_9 = arith.constant 0 : index
    %c0_10 = arith.constant 0 : index
    %11 = vector.load %arg4[%c0_9, %c0_10] : memref<1x128xf32, #tpu.memory_space<vmem>>, vector<1x128xf32>
    tpu.vector_store %arg4[%c0_9, %c0_10], %10 {strides = array<i32>} : memref<1x128xf32, #tpu.memory_space<vmem>>, vector<1x128xf32>,
    %c0_11 = arith.constant 0 : index
    %c0_12 = arith.constant 0 : index
    %12 = vector.load %arg5[%c0_11, %c0_12] : memref<1x128xf32, #tpu.memory_space<vmem>>, vector<1x128xf32>
    %13 = arith.mulf %5, %5 : vector<64x128xf32>
    %cst_13 = arith.constant dense<0.000000e+00> : vector<128xf32>
    %14 = vector.multi_reduction <add>, %13, %cst_13 [0] : vector<64x128xf32> to vector<128xf32>
    %15 = vector.shape_cast %14 : vector<128xf32> to vector<1x128xf32>
    %16 = arith.addf %12, %15 : vector<1x128xf32>
    %c0_14 = arith.constant 0 : index
    %c0_15 = arith.constant 0 : index
    %17 = vector.load %arg5[%c0_14, %c0_15] : memref<1x128xf32, #tpu.memory_space<vmem>>, vector<1x128xf32>
    tpu.vector_store %arg5[%c0_14, %c0_15], %16 {strides = array<i32>} : memref<1x128xf32, #tpu.memory_space<vmem>>, vector<1x128xf32>,
    return
  }
  func.func @transform_0(%arg0: i32) -> (i32, i32) {
    %c0_i32 = arith.constant 0 : i32
    %c0_i32_0 = arith.constant 0 : i32
    return %arg0, %c0_i32 : i32, i32
  }
  func.func @transform_1(%arg0: i32) -> (i32, i32) {
    %c0_i32 = arith.constant 0 : i32
    %c0_i32_0 = arith.constant 0 : i32
    %c0_i32_1 = arith.constant 0 : i32
    return %c0_i32, %c0_i32_0 : i32, i32
  }
  func.func @transform_2(%arg0: i32) -> (i32, i32) {
    %c0_i32 = arith.constant 0 : i32
    %c0_i32_0 = arith.constant 0 : i32
    return %arg0, %c0_i32 : i32, i32
  }
  func.func @transform_3(%arg0: i32) -> (i32, i32) {
    %c0_i32 = arith.constant 0 : i32
    %c0_i32_0 = arith.constant 0 : i32
    %c0_i32_1 = arith.constant 0 : i32
    return %c0_i32, %c0_i32_0 : i32, i32
  }
  func.func @transform_4(%arg0: i32) -> (i32, i32) {
    %c0_i32 = arith.constant 0 : i32
    %c0_i32_0 = arith.constant 0 : i32
    %c0_i32_1 = arith.constant 0 : i32
    return %c0_i32, %c0_i32_0 : i32, i32
  }
}

module attributes {stable_mosaic.version = 11 : i64} {
  func.func @_bn_act_kernel(%arg0: i32, %arg1: memref<64x128xf32, #tpu.memory_space<vmem>>, %arg2: memref<1x128xf32, #tpu.memory_space<vmem>>, %arg3: memref<1x128xf32, #tpu.memory_space<vmem>>, %arg4: memref<64x128xf32, #tpu.memory_space<vmem>>) attributes {dimension_semantics = [#tpu.dimension_semantics<parallel>], iteration_bounds = array<i64: 2>, scalar_prefetch = 0 : i64, scratch_operands = 0 : i64, tpu.core_type = #tpu.core_type<tc>, window_params = [{transform_indices = @transform_0, window_bounds = array<i64: 64, 128>}, {pipeline_mode = #tpu.pipeline_mode<synchronous>, transform_indices = @transform_1, window_bounds = array<i64: 1, 128>}, {pipeline_mode = #tpu.pipeline_mode<synchronous>, transform_indices = @transform_2, window_bounds = array<i64: 1, 128>}, {transform_indices = @transform_3, window_bounds = array<i64: 64, 128>}]} {
    %c0 = arith.constant 0 : index
    %c0_0 = arith.constant 0 : index
    %0 = vector.load %arg1[%c0, %c0_0] : memref<64x128xf32, #tpu.memory_space<vmem>>, vector<64x128xf32>
    %c0_1 = arith.constant 0 : index
    %c0_2 = arith.constant 0 : index
    %1 = vector.load %arg2[%c0_1, %c0_2] : memref<1x128xf32, #tpu.memory_space<vmem>>, vector<1x128xf32>
    %2 = vector.broadcast %1 : vector<1x128xf32> to vector<64x128xf32>
    %3 = arith.mulf %0, %2 : vector<64x128xf32>
    %c0_3 = arith.constant 0 : index
    %c0_4 = arith.constant 0 : index
    %4 = vector.load %arg3[%c0_3, %c0_4] : memref<1x128xf32, #tpu.memory_space<vmem>>, vector<1x128xf32>
    %5 = vector.broadcast %4 : vector<1x128xf32> to vector<64x128xf32>
    %6 = arith.addf %3, %5 : vector<64x128xf32>
    %cst = arith.constant 0.000000e+00 : f32
    %7 = vector.broadcast %cst : f32 to vector<64x128xf32>
    %8 = arith.maximumf %6, %7 : vector<64x128xf32>
    %c0_5 = arith.constant 0 : index
    %c0_6 = arith.constant 0 : index
    %9 = vector.load %arg4[%c0_5, %c0_6] : memref<64x128xf32, #tpu.memory_space<vmem>>, vector<64x128xf32>
    tpu.vector_store %arg4[%c0_5, %c0_6], %8 {strides = array<i32>} : memref<64x128xf32, #tpu.memory_space<vmem>>, vector<64x128xf32>,
    return
  }
  func.func @transform_0(%arg0: i32) -> (i32, i32) {
    %c0_i32 = arith.constant 0 : i32
    %c0_i32_0 = arith.constant 0 : i32
    return %arg0, %c0_i32 : i32, i32
  }
  func.func @transform_1(%arg0: i32) -> (i32, i32) {
    %c0_i32 = arith.constant 0 : i32
    %c0_i32_0 = arith.constant 0 : i32
    %c0_i32_1 = arith.constant 0 : i32
    return %c0_i32, %c0_i32_0 : i32, i32
  }
  func.func @transform_2(%arg0: i32) -> (i32, i32) {
    %c0_i32 = arith.constant 0 : i32
    %c0_i32_0 = arith.constant 0 : i32
    %c0_i32_1 = arith.constant 0 : i32
    return %c0_i32, %c0_i32_0 : i32, i32
  }
  func.func @transform_3(%arg0: i32) -> (i32, i32) {
    %c0_i32 = arith.constant 0 : i32
    %c0_i32_0 = arith.constant 0 : i32
    return %arg0, %c0_i32 : i32, i32
  }
}

module attributes {stable_mosaic.version = 11 : i64} {
  func.func @_bn_add_bn_relu_kernel(%arg0: i32, %arg1: memref<64x128xf32, #tpu.memory_space<vmem>>, %arg2: memref<1x128xf32, #tpu.memory_space<vmem>>, %arg3: memref<1x128xf32, #tpu.memory_space<vmem>>, %arg4: memref<64x128xf32, #tpu.memory_space<vmem>>, %arg5: memref<1x128xf32, #tpu.memory_space<vmem>>, %arg6: memref<1x128xf32, #tpu.memory_space<vmem>>, %arg7: memref<64x128xf32, #tpu.memory_space<vmem>>) attributes {dimension_semantics = [#tpu.dimension_semantics<parallel>], iteration_bounds = array<i64: 2>, scalar_prefetch = 0 : i64, scratch_operands = 0 : i64, tpu.core_type = #tpu.core_type<tc>, window_params = [{transform_indices = @transform_0, window_bounds = array<i64: 64, 128>}, {pipeline_mode = #tpu.pipeline_mode<synchronous>, transform_indices = @transform_1, window_bounds = array<i64: 1, 128>}, {pipeline_mode = #tpu.pipeline_mode<synchronous>, transform_indices = @transform_2, window_bounds = array<i64: 1, 128>}, {transform_indices = @transform_3, window_bounds = array<i64: 64, 128>}, {pipeline_mode = #tpu.pipeline_mode<synchronous>, transform_indices = @transform_4, window_bounds = array<i64: 1, 128>}, {pipeline_mode = #tpu.pipeline_mode<synchronous>, transform_indices = @transform_5, window_bounds = array<i64: 1, 128>}, {transform_indices = @transform_6, window_bounds = array<i64: 64, 128>}]} {
    %c0 = arith.constant 0 : index
    %c0_0 = arith.constant 0 : index
    %0 = vector.load %arg1[%c0, %c0_0] : memref<64x128xf32, #tpu.memory_space<vmem>>, vector<64x128xf32>
    %c0_1 = arith.constant 0 : index
    %c0_2 = arith.constant 0 : index
    %1 = vector.load %arg2[%c0_1, %c0_2] : memref<1x128xf32, #tpu.memory_space<vmem>>, vector<1x128xf32>
    %2 = vector.broadcast %1 : vector<1x128xf32> to vector<64x128xf32>
    %3 = arith.mulf %0, %2 : vector<64x128xf32>
    %c0_3 = arith.constant 0 : index
    %c0_4 = arith.constant 0 : index
    %4 = vector.load %arg3[%c0_3, %c0_4] : memref<1x128xf32, #tpu.memory_space<vmem>>, vector<1x128xf32>
    %5 = vector.broadcast %4 : vector<1x128xf32> to vector<64x128xf32>
    %6 = arith.addf %3, %5 : vector<64x128xf32>
    %c0_5 = arith.constant 0 : index
    %c0_6 = arith.constant 0 : index
    %7 = vector.load %arg4[%c0_5, %c0_6] : memref<64x128xf32, #tpu.memory_space<vmem>>, vector<64x128xf32>
    %c0_7 = arith.constant 0 : index
    %c0_8 = arith.constant 0 : index
    %8 = vector.load %arg5[%c0_7, %c0_8] : memref<1x128xf32, #tpu.memory_space<vmem>>, vector<1x128xf32>
    %9 = vector.broadcast %8 : vector<1x128xf32> to vector<64x128xf32>
    %10 = arith.mulf %7, %9 : vector<64x128xf32>
    %c0_9 = arith.constant 0 : index
    %c0_10 = arith.constant 0 : index
    %11 = vector.load %arg6[%c0_9, %c0_10] : memref<1x128xf32, #tpu.memory_space<vmem>>, vector<1x128xf32>
    %12 = vector.broadcast %11 : vector<1x128xf32> to vector<64x128xf32>
    %13 = arith.addf %10, %12 : vector<64x128xf32>
    %14 = arith.addf %6, %13 : vector<64x128xf32>
    %cst = arith.constant 0.000000e+00 : f32
    %15 = vector.broadcast %cst : f32 to vector<64x128xf32>
    %16 = arith.maximumf %14, %15 : vector<64x128xf32>
    %c0_11 = arith.constant 0 : index
    %c0_12 = arith.constant 0 : index
    %17 = vector.load %arg7[%c0_11, %c0_12] : memref<64x128xf32, #tpu.memory_space<vmem>>, vector<64x128xf32>
    tpu.vector_store %arg7[%c0_11, %c0_12], %16 {strides = array<i32>} : memref<64x128xf32, #tpu.memory_space<vmem>>, vector<64x128xf32>,
    return
  }
  func.func @transform_0(%arg0: i32) -> (i32, i32) {
    %c0_i32 = arith.constant 0 : i32
    %c0_i32_0 = arith.constant 0 : i32
    return %arg0, %c0_i32 : i32, i32
  }
  func.func @transform_1(%arg0: i32) -> (i32, i32) {
    %c0_i32 = arith.constant 0 : i32
    %c0_i32_0 = arith.constant 0 : i32
    %c0_i32_1 = arith.constant 0 : i32
    return %c0_i32, %c0_i32_0 : i32, i32
  }
  func.func @transform_2(%arg0: i32) -> (i32, i32) {
    %c0_i32 = arith.constant 0 : i32
    %c0_i32_0 = arith.constant 0 : i32
    %c0_i32_1 = arith.constant 0 : i32
    return %c0_i32, %c0_i32_0 : i32, i32
  }
  func.func @transform_3(%arg0: i32) -> (i32, i32) {
    %c0_i32 = arith.constant 0 : i32
    %c0_i32_0 = arith.constant 0 : i32
    return %arg0, %c0_i32 : i32, i32
  }
  func.func @transform_4(%arg0: i32) -> (i32, i32) {
    %c0_i32 = arith.constant 0 : i32
    %c0_i32_0 = arith.constant 0 : i32
    %c0_i32_1 = arith.constant 0 : i32
    return %c0_i32, %c0_i32_0 : i32, i32
  }
  func.func @transform_5(%arg0: i32) -> (i32, i32) {
    %c0_i32 = arith.constant 0 : i32
    %c0_i32_0 = arith.constant 0 : i32
    %c0_i32_1 = arith.constant 0 : i32
    return %c0_i32, %c0_i32_0 : i32, i32
  }
  func.func @transform_6(%arg0: i32) -> (i32, i32) {
    %c0_i32 = arith.constant 0 : i32
    %c0_i32_0 = arith.constant 0 : i32
    return %arg0, %c0_i32 : i32, i32
  }
}

</mosaic_0001>

<llo_original>
// kernel: basic_block_forward.6
$region0: #{basic_block_forward.6}
  #allocation0 [shape = 'u32[]', space=smem, size = 0x4, offset = 0x4, fixed_abs, tag = 'smem constant byte address 0x4 - core index']
  #allocation1 [shape = 'u32[144,128]{1,0:T(1,128)}', space=vmem, size = 0x12000, scoped, tag = 'internal scratch']
  %s0 = inlined_call_operand.vmem [shape: f32[128,128], index: 0, kind: input, shape index: {}]
  %s1 = inlined_call_operand.vmem [shape: f32[1,128], index: 1, kind: input, shape index: {}]
  %s2 = inlined_call_operand.vmem [shape: f32[1,128], index: 2, kind: input, shape index: {}]
  %s3 = inlined_call_operand.vmem [shape: f32[128,128], index: 3, kind: output, shape index: {}]
  %s4 = sld [smem:[#allocation0]]
  $region45: #{basic_block_forward.6} parent=0
    _
  %s6 = ssub.s32 1, %s4
  %s7 = scalar_select 0, %s6, %s4
  loop: start=0, step=1, limit=4
  $region2: #{basic_block_forward.6} parent=0 // loop_pre_header
    _
  $region3: #{basic_block_forward.6} parent=0 // loop_header
    %s9 = sphi 0, %s13
    %p10 = scmp.ge.s32.totalorder %s9, 4
    %s19 = sphi 0, %s21
    %s22 = sphi 0, %s19
    %s23 = sphi 0, %s22
    %s39 = sphi 0, %s23
    %s43 = sphi 0, %s43
    %s45 = sphi 0, %s43
    %s46 = sphi 0, %s45
    %s60 = sphi 0, %s46
    %s64 = sphi 0, %s64
    %s66 = sphi 0, %s64
    %s67 = sphi 0, %s66
    %s81 = sphi 0, %s67
    %s87 = sphi 0, %s89
    %s90 = sphi 0, %s87
    %s91 = sphi 0, %s90
    %s107 = sphi 0, %s91
  $region4: #{basic_block_forward.6} parent=0 // loop_header_branch
    %12 = sbr.rel (%p10) target = $region8
  $region5: #{basic_block_forward.6} parent=0 // loop_body
    %s14 = ssub.s32 %s9, 1
    %s15 = ssub.s32 %s9, 2
    %s16 = sadd.s32 %s9, 1
    %s17 = ssub.s32 %s9, %s16
    %p18 = scmp.eq.s32.totalorder %s17, 0
    %s20 = sadd.s32 %s19, 1
    %s21 = scalar_select %p18, %s19, %s20
    %p24 = pneg %p18
    %p25 = scmp.eq.s32.totalorder %s9, 1
    %p26 = por %p24, %p25
    %p27 = scmp.ne.s32.totalorder %s19, %s22
    %p28 = scmp.eq.s32.totalorder %s9, 0
    %p29 = por %p27, %p28
    %p30 = scmp.ne.s32.totalorder %s19, %s22
    %p31 = scmp.eq.s32.totalorder %s14, 1
    %p32 = por %p30, %p31
    %p33 = scmp.ne.s32.totalorder %s22, %s23
    %p34 = scmp.eq.s32.totalorder %s14, 0
    %p35 = por %p33, %p34
    %p36 = scmp.ne.s32.totalorder %s22, %s23
    %p37 = scmp.eq.s32.totalorder %s15, 1
    %p38 = por %p36, %p37
    %p40 = scmp.ne.s32.totalorder %s23, %s39
    %p41 = scmp.eq.s32.totalorder %s15, 0
    %p42 = por %p40, %p41
    %s44 = sadd.s32 %s43, 1
    %p47 = scmp.eq.s32.totalorder %s9, 1
    %p48 = scmp.ne.s32.totalorder %s43, %s45
    %p49 = scmp.eq.s32.totalorder %s9, 0
    %p50 = por %p48, %p49
    %p51 = scmp.ne.s32.totalorder %s43, %s45
    %p52 = scmp.eq.s32.totalorder %s14, 1
    %p53 = por %p51, %p52
    %p54 = scmp.ne.s32.totalorder %s45, %s46
    %p55 = scmp.eq.s32.totalorder %s14, 0
    %p56 = por %p54, %p55
    %p57 = scmp.ne.s32.totalorder %s45, %s46
    %p58 = scmp.eq.s32.totalorder %s15, 1
    %p59 = por %p57, %p58
    %p61 = scmp.ne.s32.totalorder %s46, %s60
    %p62 = scmp.eq.s32.totalorder %s15, 0
    %p63 = por %p61, %p62
    %s65 = sadd.s32 %s64, 1
    %p68 = scmp.eq.s32.totalorder %s9, 1
    %p69 = scmp.ne.s32.totalorder %s64, %s66
    %p70 = scmp.eq.s32.totalorder %s9, 0
    %p71 = por %p69, %p70
    %p72 = scmp.ne.s32.totalorder %s64, %s66
    %p73 = scmp.eq.s32.totalorder %s14, 1
    %p74 = por %p72, %p73
    %p75 = scmp.ne.s32.totalorder %s66, %s67
    %p76 = scmp.eq.s32.totalorder %s14, 0
    %p77 = por %p75, %p76
    %p78 = scmp.ne.s32.totalorder %s66, %s67
    %p79 = scmp.eq.s32.totalorder %s15, 1
    %p80 = por %p78, %p79
    %p82 = scmp.ne.s32.totalorder %s67, %s81
    %p83 = scmp.eq.s32.totalorder %s15, 0
    %p84 = por %p82, %p83
    %s85 = ssub.s32 %s9, %s16
    %p86 = scmp.eq.s32.totalorder %s85, 0
    %s88 = sadd.s32 %s87, 1
    %s89 = scalar_select %p86, %s87, %s88
    %p92 = pneg %p86
    %p93 = scmp.eq.s32.totalorder %s9, 1
    %p94 = por %p92, %p93
    %p95 = scmp.ne.s32.totalorder %s87, %s90
    %p96 = scmp.eq.s32.totalorder %s9, 0
    %p97 = por %p95, %p96
    %p98 = scmp.ne.s32.totalorder %s87, %s90
    %p99 = scmp.eq.s32.totalorder %s14, 1
    %p100 = por %p98, %p99
    %p101 = scmp.ne.s32.totalorder %s90, %s91
    %p102 = scmp.eq.s32.totalorder %s14, 0
    %p103 = por %p101, %p102
    %p104 = scmp.ne.s32.totalorder %s90, %s91
    %p105 = scmp.eq.s32.totalorder %s15, 1
    %p106 = por %p104, %p105
    %p108 = scmp.ne.s32.totalorder %s91, %s107
    %p109 = scmp.eq.s32.totalorder %s15, 0
    %p110 = por %p108, %p109
    %p111 = scmp.le.s32.totalorder 1, %s9
    %p112 = scmp.lt.s32.totalorder %s9, 3
    %p113 = pnand %p111, %p112
    %p114 = pneg %p113
    // Predicated region
    $region9: #{basic_block_forward.6} parent=5 // pred_check
      _
    $region10: #{basic_block_forward.6} parent=5 // pred_check_branch
      %116 = sbr.rel (%p113) target = $region12
    $region11: #{basic_block_forward.6} parent=5 // pred_region
      %s117 = ssub.s32 %s9, 1
      // Predicated region
      $region13: #{basic_block_forward.6} parent=11 // pred_check
        %p118 = pneg %p56
      $region14: #{basic_block_forward.6} parent=11 // pred_check_branch
        %120 = sbr.rel (%p118) target = $region16
      $region15: #{basic_block_forward.6} parent=11 // pred_region
        _
      $region16: #{basic_block_forward.6} parent=11 // pred_fallthru
        _
      // Predicated region
      $region17: #{basic_block_forward.6} parent=11 // pred_check
        %p121 = pneg %p77
      $region18: #{basic_block_forward.6} parent=11 // pred_check_branch
        %123 = sbr.rel (%p121) target = $region20
      $region19: #{basic_block_forward.6} parent=11 // pred_region
        _
      $region20: #{basic_block_forward.6} parent=11 // pred_fallthru
        _
    $region12: #{basic_block_forward.6} parent=5 // pred_fallthru
      _
    %p124 = scmp.lt.s32.totalorder %s9, 2
    // Predicated region
    $region21: #{basic_block_forward.6} parent=5 // pred_check
      %p125 = pneg %p124
    $region22: #{basic_block_forward.6} parent=5 // pred_check_branch
      %127 = sbr.rel (%p125) target = $region24
    $region23: #{basic_block_forward.6} parent=5 // pred_region
      // Predicated region
      $region25: #{basic_block_forward.6} parent=23 // pred_check
        %p128 = pneg %p29
      $region26: #{basic_block_forward.6} parent=23 // pred_check_branch
        %130 = sbr.rel (%p128) target = $region28
      $region27: #{basic_block_forward.6} parent=23 // pred_region
        %s131 = smul.u32 8, %s9
        %p132 = scmp.lt.s32.totalorder %s131, 15
        %s133 = scalar_select %p132, %s131, 15
        %s134 = smul.addr %s133, 8
        %s135 = scalar_lea.vmem %s0, %s134
        %s136 = smul.u32 8, %s9
      $region28: #{basic_block_forward.6} parent=23 // pred_fallthru
        _
    $region24: #{basic_block_forward.6} parent=5 // pred_fallthru
      _
    %p137 = scmp.le.s32.totalorder 1, %s9
    %p138 = scmp.lt.s32.totalorder %s9, 3
    %p139 = pnand %p137, %p138
    %p140 = pneg %p139
    // Predicated region
    $region29: #{basic_block_forward.6} parent=5 // pred_check
      _
    $region30: #{basic_block_forward.6} parent=5 // pred_check_branch
      %142 = sbr.rel (%p139) target = $region32
    $region31: #{basic_block_forward.6} parent=5 // pred_region
      %s143 = ssub.s32 %s9, 1
      %s144 = smul.u32 8, %s14
      %p145 = scmp.lt.s32.totalorder %s144, 15
      %s146 = scalar_select %p145, %s144, 15
      %s147 = smul.addr %s146, 8
      %s148 = scalar_lea.vmem %s0, %s147
      %p149 = pneg %p35
      %p150 = pneg %p32
      %p151 = pneg %p56
      %p152 = pneg %p53
      %p153 = pneg %p77
      %p154 = pneg %p74
      %p155 = pneg %p103
      %p156 = pneg %p100
      %s157 = smul.u32 8, %s14
      %p158 = scmp.lt.s32.totalorder %s157, 15
      %s159 = scalar_select %p158, %s157, 15
      %s160 = smul.addr %s159, 8
      %s161 = scalar_lea.vmem %s3, %s160
      %s162 = smul.u32 8, %s14
      %p163 = scmp.lt.s32.totalorder %s162, 15
      %s164 = scalar_select %p163, %s162, 15
      %s165 = smul.addr %s164, 8
      %s166 = scalar_lea.vmem %s0, %s165
      %s167 = smul.u32 8, %s14
      %s168 = smul.u32 8, %s14
      %p169 = scmp.lt.s32.totalorder %s168, 15
      %s170 = scalar_select %p169, %s168, 15
      %s171 = smul.addr %s170, 8
      %s172 = scalar_lea.vmem %s3, %s171
      %s173 = smul.u32 8, %s14
      %v174 = vld [vmem:[%s166] sm:$0xff]
      %v175 = vld [vmem:[%s166 + $0x8] sm:$0xff]
      %v176 = vld [vmem:[%s166 + $0x10] sm:$0xff]
      %v177 = vld [vmem:[%s166 + $0x18] sm:$0xff]
      %v178 = vld [vmem:[%s166 + $0x20] sm:$0xff]
      %v179 = vld [vmem:[%s166 + $0x28] sm:$0xff]
      %v180 = vld [vmem:[%s166 + $0x30] sm:$0xff]
      %v181 = vld [vmem:[%s166 + $0x38] sm:$0xff]
      %v182 = vld [vmem:[%s1] sm:$0x1]
      %v184 = vlaneseq
      %v185 = vshrl.u32 %v184, 7
      %v186 = vsub.s32 0, %v185
      %v187 = vrot.slane %v182, %v186
      %v189 = vmul.f32 %v174, %v187
      %v190 = vmul.f32 %v175, %v187
      %v191 = vmul.f32 %v176, %v187
      %v192 = vmul.f32 %v177, %v187
      %v193 = vmul.f32 %v178, %v187
      %v194 = vmul.f32 %v179, %v187
      %v195 = vmul.f32 %v180, %v187
      %v196 = vmul.f32 %v181, %v187
      %v197 = vld [vmem:[%s2] sm:$0x1]
      %v199 = vlaneseq
      %v200 = vshrl.u32 %v199, 7
      %v201 = vsub.s32 0, %v200
      %v202 = vrot.slane %v197, %v201
      %v204 = vadd.f32 %v189, %v202
      %v205 = vadd.f32 %v190, %v202
      %v206 = vadd.f32 %v191, %v202
      %v207 = vadd.f32 %v192, %v202
      %v208 = vadd.f32 %v193, %v202
      %v209 = vadd.f32 %v194, %v202
      %v210 = vadd.f32 %v195, %v202
      %v211 = vadd.f32 %v196, %v202
      %v212 = vmax.f32 %v204, 0.0
      %v213 = vmax.f32 %v205, 0.0
      %v214 = vmax.f32 %v206, 0.0
      %v215 = vmax.f32 %v207, 0.0
      %v216 = vmax.f32 %v208, 0.0
      %v217 = vmax.f32 %v209, 0.0
      %v218 = vmax.f32 %v210, 0.0
      %v219 = vmax.f32 %v211, 0.0
      %220 = vst [vmem:[%s172] sm:$0xff] %v212
      %221 = vst [vmem:[%s172 + $0x8] sm:$0xff] %v213
      %222 = vst [vmem:[%s172 + $0x10] sm:$0xff] %v214
      %223 = vst [vmem:[%s172 + $0x18] sm:$0xff] %v215
      %224 = vst [vmem:[%s172 + $0x20] sm:$0xff] %v216
      %225 = vst [vmem:[%s172 + $0x28] sm:$0xff] %v217
      %226 = vst [vmem:[%s172 + $0x30] sm:$0xff] %v218
      %227 = vst [vmem:[%s172 + $0x38] sm:$0xff] %v219
      %s228 = smul.u32 8, %s14
      %p229 = scmp.lt.s32.totalorder %s228, 15
      %s230 = scalar_select %p229, %s228, 15
      %s231 = smul.addr %s230, 8
      %s232 = scalar_lea.vmem %s3, %s231
      // Predicated region
      $region33: #{basic_block_forward.6} parent=31 // pred_check
        %p233 = pneg %p100
      $region34: #{basic_block_forward.6} parent=31 // pred_check_branch
        %235 = sbr.rel (%p233) target = $region36
      $region35: #{basic_block_forward.6} parent=31 // pred_region
        %s236 = smul.u32 8, %s14
      $region36: #{basic_block_forward.6} parent=31 // pred_fallthru
        _
    $region32: #{basic_block_forward.6} parent=5 // pred_fallthru
      _
    %p237 = scmp.le.s32.totalorder 2, %s9
    // Predicated region
    $region37: #{basic_block_forward.6} parent=5 // pred_check
      %p238 = pneg %p237
    $region38: #{basic_block_forward.6} parent=5 // pred_check_branch
      %240 = sbr.rel (%p238) target = $region40
    $region39: #{basic_block_forward.6} parent=5 // pred_region
      %s241 = ssub.s32 %s9, 2
      // Predicated region
      $region41: #{basic_block_forward.6} parent=39 // pred_check
        %p242 = pneg %p106
      $region42: #{basic_block_forward.6} parent=39 // pred_check_branch
        %244 = sbr.rel (%p242) target = $region44
      $region43: #{basic_block_forward.6} parent=39 // pred_region
        %s245 = smul.u32 8, %s15
        %p246 = scmp.lt.s32.totalorder %s245, 15
        %s247 = scalar_select %p246, %s245, 15
        %s248 = smul.addr %s247, 8
        %s249 = scalar_lea.vmem %s3, %s248
      $region44: #{basic_block_forward.6} parent=39 // pred_fallthru
        _
    $region40: #{basic_block_forward.6} parent=5 // pred_fallthru
      _
  $region6: #{basic_block_forward.6} parent=0 // loop_footer
    %s13 = sadd.s32 1, %s9
  $region7: #{basic_block_forward.6} parent=0 // loop_footer_branch
    %8 = sbr.rel target = $region3
  $region8: #{basic_block_forward.6} parent=0 // loop_exit
    _

// kernel: basic_block_forward.5
$region0: #{basic_block_forward.5}
  #allocation0 [shape = 'u32[]', space=smem, size = 0x4, offset = 0x4, fixed_abs, tag = 'smem constant byte address 0x4 - core index']
  #allocation1 [shape = 'u32[144,128]{1,0:T(1,128)}', space=vmem, size = 0x12000, scoped, tag = 'internal scratch']
  %s0 = inlined_call_operand.vmem [shape: bf16[128,128], index: 0, kind: input, shape index: {}]
  %s1 = inlined_call_operand.vmem [shape: bf16[128,128], index: 1, kind: input, shape index: {}]
  %s2 = inlined_call_operand.vmem [shape: f32[128,128], index: 2, kind: output, shape index: {0}]
  %s3 = inlined_call_operand.vmem [shape: f32[1,128], index: 3, kind: output, shape index: {1}]
  %s4 = inlined_call_operand.vmem [shape: f32[1,128], index: 4, kind: output, shape index: {2}]
  %5 = xla_tuple %s2, %s3, %s4
  %s6 = sld [smem:[#allocation0]]
  $region61: #{basic_block_forward.5} parent=0
    _
  %s8 = ssub.s32 1, %s6
  %s9 = scalar_select 0, %s8, %s6
  loop: start=0, step=1, limit=4
  $region2: #{basic_block_forward.5} parent=0 // loop_pre_header
    _
  $region3: #{basic_block_forward.5} parent=0 // loop_header
    %s11 = sphi 0, %s15
    %p12 = scmp.ge.s32.totalorder %s11, 4
    %s21 = sphi 0, %s23
    %s24 = sphi 0, %s21
    %s25 = sphi 0, %s24
    %s41 = sphi 0, %s25
    %s45 = sphi 0, %s45
    %s47 = sphi 0, %s45
    %s48 = sphi 0, %s47
    %s62 = sphi 0, %s48
    %s68 = sphi 0, %s70
    %s71 = sphi 0, %s68
    %s72 = sphi 0, %s71
    %s88 = sphi 0, %s72
    %s92 = sphi 0, %s92
    %s94 = sphi 0, %s92
    %s95 = sphi 0, %s94
    %s109 = sphi 0, %s95
    %s113 = sphi 0, %s113
    %s115 = sphi 0, %s113
    %s116 = sphi 0, %s115
    %s130 = sphi 0, %s116
  $region4: #{basic_block_forward.5} parent=0 // loop_header_branch
    %14 = sbr.rel (%p12) target = $region8
  $region5: #{basic_block_forward.5} parent=0 // loop_body
    %s16 = ssub.s32 %s11, 1
    %s17 = ssub.s32 %s11, 2
    %s18 = sadd.s32 %s11, 1
    %s19 = ssub.s32 %s11, %s18
    %p20 = scmp.eq.s32.totalorder %s19, 0
    %s22 = sadd.s32 %s21, 1
    %s23 = scalar_select %p20, %s21, %s22
    %p26 = pneg %p20
    %p27 = scmp.eq.s32.totalorder %s11, 1
    %p28 = por %p26, %p27
    %p29 = scmp.ne.s32.totalorder %s21, %s24
    %p30 = scmp.eq.s32.totalorder %s11, 0
    %p31 = por %p29, %p30
    %p32 = scmp.ne.s32.totalorder %s21, %s24
    %p33 = scmp.eq.s32.totalorder %s16, 1
    %p34 = por %p32, %p33
    %p35 = scmp.ne.s32.totalorder %s24, %s25
    %p36 = scmp.eq.s32.totalorder %s16, 0
    %p37 = por %p35, %p36
    %p38 = scmp.ne.s32.totalorder %s24, %s25
    %p39 = scmp.eq.s32.totalorder %s17, 1
    %p40 = por %p38, %p39
    %p42 = scmp.ne.s32.totalorder %s25, %s41
    %p43 = scmp.eq.s32.totalorder %s17, 0
    %p44 = por %p42, %p43
    %s46 = sadd.s32 %s45, 1
    %p49 = scmp.eq.s32.totalorder %s11, 1
    %p50 = scmp.ne.s32.totalorder %s45, %s47
    %p51 = scmp.eq.s32.totalorder %s11, 0
    %p52 = por %p50, %p51
    %p53 = scmp.ne.s32.totalorder %s45, %s47
    %p54 = scmp.eq.s32.totalorder %s16, 1
    %p55 = por %p53, %p54
    %p56 = scmp.ne.s32.totalorder %s47, %s48
    %p57 = scmp.eq.s32.totalorder %s16, 0
    %p58 = por %p56, %p57
    %p59 = scmp.ne.s32.totalorder %s47, %s48
    %p60 = scmp.eq.s32.totalorder %s17, 1
    %p61 = por %p59, %p60
    %p63 = scmp.ne.s32.totalorder %s48, %s62
    %p64 = scmp.eq.s32.totalorder %s17, 0
    %p65 = por %p63, %p64
    %s66 = ssub.s32 %s11, %s18
    %p67 = scmp.eq.s32.totalorder %s66, 0
    %s69 = sadd.s32 %s68, 1
    %s70 = scalar_select %p67, %s68, %s69
    %p73 = pneg %p67
    %p74 = scmp.eq.s32.totalorder %s11, 1
    %p75 = por %p73, %p74
    %p76 = scmp.ne.s32.totalorder %s68, %s71
    %p77 = scmp.eq.s32.totalorder %s11, 0
    %p78 = por %p76, %p77
    %p79 = scmp.ne.s32.totalorder %s68, %s71
    %p80 = scmp.eq.s32.totalorder %s16, 1
    %p81 = por %p79, %p80
    %p82 = scmp.ne.s32.totalorder %s71, %s72
    %p83 = scmp.eq.s32.totalorder %s16, 0
    %p84 = por %p82, %p83
    %p85 = scmp.ne.s32.totalorder %s71, %s72
    %p86 = scmp.eq.s32.totalorder %s17, 1
    %p87 = por %p85, %p86
    %p89 = scmp.ne.s32.totalorder %s72, %s88
    %p90 = scmp.eq.s32.totalorder %s17, 0
    %p91 = por %p89, %p90
    %s93 = sadd.s32 %s92, 1
    %p96 = scmp.eq.s32.totalorder %s11, 1
    %p97 = scmp.ne.s32.totalorder %s92, %s94
    %p98 = scmp.eq.s32.totalorder %s11, 0
    %p99 = por %p97, %p98
    %p100 = scmp.ne.s32.totalorder %s92, %s94
    %p101 = scmp.eq.s32.totalorder %s16, 1
    %p102 = por %p100, %p101
    %p103 = scmp.ne.s32.totalorder %s94, %s95
    %p104 = scmp.eq.s32.totalorder %s16, 0
    %p105 = por %p103, %p104
    %p106 = scmp.ne.s32.totalorder %s94, %s95
    %p107 = scmp.eq.s32.totalorder %s17, 1
    %p108 = por %p106, %p107
    %p110 = scmp.ne.s32.totalorder %s95, %s109
    %p111 = scmp.eq.s32.totalorder %s17, 0
    %p112 = por %p110, %p111
    %s114 = sadd.s32 %s113, 1
    %p117 = scmp.eq.s32.totalorder %s11, 1
    %p118 = scmp.ne.s32.totalorder %s113, %s115
    %p119 = scmp.eq.s32.totalorder %s11, 0
    %p120 = por %p118, %p119
    %p121 = scmp.ne.s32.totalorder %s113, %s115
    %p122 = scmp.eq.s32.totalorder %s16, 1
    %p123 = por %p121, %p122
    %p124 = scmp.ne.s32.totalorder %s115, %s116
    %p125 = scmp.eq.s32.totalorder %s16, 0
    %p126 = por %p124, %p125
    %p127 = scmp.ne.s32.totalorder %s115, %s116
    %p128 = scmp.eq.s32.totalorder %s17, 1
    %p129 = por %p127, %p128
    %p131 = scmp.ne.s32.totalorder %s116, %s130
    %p132 = scmp.eq.s32.totalorder %s17, 0
    %p133 = por %p131, %p132
    %p134 = scmp.le.s32.totalorder 1, %s11
    %p135 = scmp.lt.s32.totalorder %s11, 3
    %p136 = pnand %p134, %p135
    %p137 = pneg %p136
    // Predicated region
    $region9: #{basic_block_forward.5} parent=5 // pred_check
      _
    $region10: #{basic_block_forward.5} parent=5 // pred_check_branch
      %139 = sbr.rel (%p136) target = $region12
    $region11: #{basic_block_forward.5} parent=5 // pred_region
      %s140 = ssub.s32 %s11, 1
      // Predicated region
      $region13: #{basic_block_forward.5} parent=11 // pred_check
        %p141 = pneg %p58
      $region14: #{basic_block_forward.5} parent=11 // pred_check_branch
        %143 = sbr.rel (%p141) target = $region16
      $region15: #{basic_block_forward.5} parent=11 // pred_region
        _
      $region16: #{basic_block_forward.5} parent=11 // pred_fallthru
        _
    $region12: #{basic_block_forward.5} parent=5 // pred_fallthru
      _
    %p144 = scmp.lt.s32.totalorder %s11, 2
    // Predicated region
    $region17: #{basic_block_forward.5} parent=5 // pred_check
      %p145 = pneg %p144
    $region18: #{basic_block_forward.5} parent=5 // pred_check_branch
      %147 = sbr.rel (%p145) target = $region20
    $region19: #{basic_block_forward.5} parent=5 // pred_region
      // Predicated region
      $region21: #{basic_block_forward.5} parent=19 // pred_check
        %p148 = pneg %p31
      $region22: #{basic_block_forward.5} parent=19 // pred_check_branch
        %150 = sbr.rel (%p148) target = $region24
      $region23: #{basic_block_forward.5} parent=19 // pred_region
        %s151 = smul.u32 8, %s11
        %p152 = scmp.lt.s32.totalorder %s151, 15
        %s153 = scalar_select %p152, %s151, 15
        %s154 = smul.addr %s153, 4
        %s155 = scalar_lea.vmem %s0, %s154
        %s156 = smul.u32 8, %s11
      $region24: #{basic_block_forward.5} parent=19 // pred_fallthru
        _
    $region20: #{basic_block_forward.5} parent=5 // pred_fallthru
      _
    %p157 = scmp.le.s32.totalorder 1, %s11
    %p158 = scmp.lt.s32.totalorder %s11, 3
    %p159 = pnand %p157, %p158
    %p160 = pneg %p159
    // Predicated region
    $region25: #{basic_block_forward.5} parent=5 // pred_check
      _
    $region26: #{basic_block_forward.5} parent=5 // pred_check_branch
      %162 = sbr.rel (%p159) target = $region28
    $region27: #{basic_block_forward.5} parent=5 // pred_region
      %s163 = ssub.s32 %s11, 1
      %s164 = smul.u32 8, %s16
      %p165 = scmp.lt.s32.totalorder %s164, 15
      %s166 = scalar_select %p165, %s164, 15
      %s167 = smul.addr %s166, 4
      %s168 = scalar_lea.vmem %s0, %s167
      %p169 = pneg %p37
      %p170 = pneg %p34
      %p171 = pneg %p58
      %p172 = pneg %p55
      %p173 = pneg %p84
      %p174 = pneg %p81
      %s175 = smul.u32 8, %s16
      %p176 = scmp.lt.s32.totalorder %s175, 15
      %s177 = scalar_select %p176, %s175, 15
      %s178 = smul.addr %s177, 8
      %s179 = scalar_lea.vmem %s2, %s178
      %p180 = pneg %p105
      %p181 = pneg %p102
      %p182 = pneg %p126
      %p183 = pneg %p123
      %s184 = smul.u32 8, %s16
      %p185 = scmp.lt.s32.totalorder %s184, 15
      %s186 = scalar_select %p185, %s184, 15
      %s187 = smul.addr %s186, 4
      %s188 = scalar_lea.vmem %s0, %s187
      %s189 = smul.u32 8, %s16
      %s190 = smul.u32 8, %s16
      %p191 = scmp.lt.s32.totalorder %s190, 15
      %s192 = scalar_select %p191, %s190, 15
      %s193 = smul.addr %s192, 8
      %s194 = scalar_lea.vmem %s2, %s193
      %s195 = smul.u32 8, %s16
      %p197 = scmp.eq.s32.totalorder %s16, 0
      // Predicated region
      $region29: #{basic_block_forward.5} parent=27 // pred_check
        %p198 = pneg %p197
      $region30: #{basic_block_forward.5} parent=27 // pred_check_branch
        %200 = sbr.rel (%p198) target = $region32
      $region31: #{basic_block_forward.5} parent=27 // pred_region
        %201 = vst [vmem:[%s3] sm:$0x1] 0.0
        %202 = vst [vmem:[%s4] sm:$0x1] 0.0
      $region32: #{basic_block_forward.5} parent=27 // pred_fallthru
        _
      %v203 = vld [vmem:[%s188] sm:$0xf]
      %v204 = vld [vmem:[%s188 + $0x4] sm:$0xf]
      %v205 = vld [vmem:[%s188 + $0x8] sm:$0xf]
      %v206 = vld [vmem:[%s188 + $0xc] sm:$0xf]
      %v207 = vld [vmem:[%s188 + $0x10] sm:$0xf]
      %v208 = vld [vmem:[%s188 + $0x14] sm:$0xf]
      %v209 = vld [vmem:[%s188 + $0x18] sm:$0xf]
      %v210 = vld [vmem:[%s188 + $0x1c] sm:$0xf]
      %v211 = vld [vmem:[%s1] sm:$0xf]
      %v212 = vld [vmem:[%s1 + $0x4] sm:$0xf]
      %v213 = vld [vmem:[%s1 + $0x8] sm:$0xf]
      %v214 = vld [vmem:[%s1 + $0xc] sm:$0xf]
      %v215 = vld [vmem:[%s1 + $0x10] sm:$0xf]
      %v216 = vld [vmem:[%s1 + $0x14] sm:$0xf]
      %v217 = vld [vmem:[%s1 + $0x18] sm:$0xf]
      %v218 = vld [vmem:[%s1 + $0x1c] sm:$0xf]
      %v219 = vld [vmem:[%s1 + $0x20] sm:$0xf]
      %v220 = vld [vmem:[%s1 + $0x24] sm:$0xf]
      %v221 = vld [vmem:[%s1 + $0x28] sm:$0xf]
      %v222 = vld [vmem:[%s1 + $0x2c] sm:$0xf]
      %v223 = vld [vmem:[%s1 + $0x30] sm:$0xf]
      %v224 = vld [vmem:[%s1 + $0x34] sm:$0xf]
      %v225 = vld [vmem:[%s1 + $0x38] sm:$0xf]
      %v226 = vld [vmem:[%s1 + $0x3c] sm:$0xf]
      %v235 = vunpack.c.l.b16 %v203
      %v236 = vunpack.c.l.b16 %v204
      %v237 = vunpack.c.l.b16 %v205
      %v238 = vunpack.c.l.b16 %v206
      %v239 = vunpack.c.l.b16 %v207
      %v240 = vunpack.c.l.b16 %v208
      %v241 = vunpack.c.l.b16 %v209
      %v242 = vunpack.c.l.b16 %v210
      %v243 = vpack.c.b16 %v236, %v235
      %v244 = vpack.c.b16 %v238, %v237
      %v245 = vpack.c.b16 %v240, %v239
      %v246 = vpack.c.b16 %v242, %v241
      %v267 = vunpack.c.l.b16 %v211
      %v268 = vunpack.c.l.b16 %v212
      %v269 = vunpack.c.l.b16 %v213
      %v270 = vunpack.c.l.b16 %v214
      %v271 = vunpack.c.l.b16 %v215
      %v272 = vunpack.c.l.b16 %v216
      %v273 = vunpack.c.l.b16 %v217
      %v274 = vunpack.c.l.b16 %v218
      %v275 = vunpack.c.l.b16 %v219
      %v276 = vunpack.c.l.b16 %v220
      %v277 = vunpack.c.l.b16 %v221
      %v278 = vunpack.c.l.b16 %v222
      %v279 = vunpack.c.l.b16 %v223
      %v280 = vunpack.c.l.b16 %v224
      %v281 = vunpack.c.l.b16 %v225
      %v282 = vunpack.c.l.b16 %v226
      %v283 = vpack.c.b16 %v268, %v267
      %v284 = vpack.c.b16 %v270, %v269
      %v285 = vpack.c.b16 %v272, %v271
      %v286 = vpack.c.b16 %v274, %v273
      %v287 = vpack.c.b16 %v276, %v275
      %v288 = vpack.c.b16 %v278, %v277
      %v289 = vpack.c.b16 %v280, %v279
      %v290 = vpack.c.b16 %v282, %v281
      %299 = vmatprep.subr.bf16.mxu0 0
      %300 = vmatpush1.bf16.msra.mxu0 %v283
      %301 = vmatprep.subr.bf16.mxu0 0
      %302 = vmatpush1.bf16.msra.mxu0 %v284
      %303 = vmatprep.subr.bf16.mxu0 0
      %304 = vmatpush1.bf16.msra.mxu0 %v285
      %305 = vmatprep.subr.bf16.mxu0 0
      %306 = vmatpush1.bf16.msra.mxu0 %v286
      %307 = vmatprep.subr.bf16.mxu0 0
      %308 = vmatpush1.bf16.msra.mxu0 %v287
      %309 = vmatprep.subr.bf16.mxu0 0
      %310 = vmatpush1.bf16.msra.mxu0 %v288
      %311 = vmatprep.subr.bf16.mxu0 0
      %312 = vmatpush1.bf16.msra.mxu0 %v289
      %313 = vmatprep.subr.bf16.mxu0 0
      %314 = vmatpush1.bf16.msra.mxu0 %v290
      %315 = vmatprep.subr.bf16.mxu0 0
      %316 = vmatpush1.bf16.msra.mxu0 0
      %317 = vmatprep.subr.bf16.mxu0 0
      %318 = vmatpush1.bf16.msra.mxu0 0
      %319 = vmatprep.subr.bf16.mxu0 0
      %320 = vmatpush1.bf16.msra.mxu0 0
      %321 = vmatprep.subr.bf16.mxu0 0
      %322 = vmatpush1.bf16.msra.mxu0 0
      %323 = vmatprep.subr.bf16.mxu0 0
      %324 = vmatpush1.bf16.msra.mxu0 0
      %325 = vmatprep.subr.bf16.mxu0 0
      %326 = vmatpush1.bf16.msra.mxu0 0
      %327 = vmatprep.subr.bf16.mxu0 0
      %328 = vmatpush1.bf16.msra.mxu0 0
      %329 = vmatprep.subr.bf16.mxu0 0
      %330 = vmatpush1.bf16.msra.mxu0 0
      %331 = vmatprep.mubr.bf16.mxu0 0
      %332 = vmatmul.mubr.bf16.gmra.mrb[0].mxu0 %v243
      %v333 = vpop.f32.mrb[0].mxu0
      %v334 = vadd.f32 0.0, %v333
      %v335 = vpop.f32.mrb[0].mxu0
      %v336 = vpop.f32.mrb[0].mxu0
      %v337 = vadd.f32 0.0, %v336
      %v338 = vpop.f32.mrb[0].mxu0
      %339 = vmatprep.mubr.bf16.mxu0 0
      %340 = vmatmul.mubr.bf16.gmra.mrb[0].mxu0 %v244
      %v341 = vpop.f32.mrb[0].mxu0
      %v342 = vadd.f32 0.0, %v341
      %v343 = vpop.f32.mrb[0].mxu0
      %v344 = vpop.f32.mrb[0].mxu0
      %v345 = vadd.f32 0.0, %v344
      %v346 = vpop.f32.mrb[0].mxu0
      %347 = vmatprep.mubr.bf16.mxu0 0
      %348 = vmatmul.mubr.bf16.gmra.mrb[0].mxu0 %v245
      %v349 = vpop.f32.mrb[0].mxu0
      %v350 = vadd.f32 0.0, %v349
      %v351 = vpop.f32.mrb[0].mxu0
      %v352 = vpop.f32.mrb[0].mxu0
      %v353 = vadd.f32 0.0, %v352
      %v354 = vpop.f32.mrb[0].mxu0
      %355 = vmatprep.mubr.bf16.mxu0 0
      %356 = vmatmul.mubr.bf16.gmra.mrb[0].mxu0 %v246
      %v357 = vpop.f32.mrb[0].mxu0
      %v358 = vadd.f32 0.0, %v357
      %v359 = vpop.f32.mrb[0].mxu0
      %v360 = vpop.f32.mrb[0].mxu0
      %v361 = vadd.f32 0.0, %v360
      %v362 = vpop.f32.mrb[0].mxu0
      %363 = vdwg.mxu0
      %364 = vst [vmem:[%s194] sm:$0xff] %v334
      %365 = vst [vmem:[%s194 + $0x8] sm:$0xff] %v337
      %366 = vst [vmem:[%s194 + $0x10] sm:$0xff] %v342
      %367 = vst [vmem:[%s194 + $0x18] sm:$0xff] %v345
      %368 = vst [vmem:[%s194 + $0x20] sm:$0xff] %v350
      %369 = vst [vmem:[%s194 + $0x28] sm:$0xff] %v353
      %370 = vst [vmem:[%s194 + $0x30] sm:$0xff] %v358
      %371 = vst [vmem:[%s194 + $0x38] sm:$0xff] %v361
      %v372 = vld [vmem:[%s3] sm:$0x1]
      %v373 = vadd.f32 %v334, %v337
      %v374 = vadd.f32 %v373, %v342
      %v375 = vadd.f32 %v374, %v345
      %v376 = vadd.f32 %v375, %v350
      %v377 = vadd.f32 %v376, %v353
      %v378 = vadd.f32 %v377, %v358
      %v379 = vadd.f32 %v378, %v361
      %v380 = vrot.slane %v379, 4
      %v381 = vadd.f32 %v379, %v380
      %v382 = vrot.slane %v381, 2
      %v383 = vadd.f32 %v381, %v382
      %v384 = vrot.slane %v383, 1
      %v385 = vadd.f32 %v383, %v384
      %v386 = vadd.f32 %v372, %v385
      %387 = vst [vmem:[%s3] sm:$0x1] %v386
      %v388 = vld [vmem:[%s4] sm:$0x1]
      %v389 = vmul.f32 %v334, %v334
      %v390 = vmul.f32 %v337, %v337
      %v391 = vmul.f32 %v342, %v342
      %v392 = vmul.f32 %v345, %v345
      %v393 = vmul.f32 %v350, %v350
      %v394 = vmul.f32 %v353, %v353
      %v395 = vmul.f32 %v358, %v358
      %v396 = vmul.f32 %v361, %v361
      %v397 = vadd.f32 %v389, %v390
      %v398 = vadd.f32 %v397, %v391
      %v399 = vadd.f32 %v398, %v392
      %v400 = vadd.f32 %v399, %v393
      %v401 = vadd.f32 %v400, %v394
      %v402 = vadd.f32 %v401, %v395
      %v403 = vadd.f32 %v402, %v396
      %v404 = vrot.slane %v403, 4
      %v405 = vadd.f32 %v403, %v404
      %v406 = vrot.slane %v405, 2
      %v407 = vadd.f32 %v405, %v406
      %v408 = vrot.slane %v407, 1
      %v409 = vadd.f32 %v407, %v408
      %v410 = vadd.f32 %v388, %v409
      %411 = vst [vmem:[%s4] sm:$0x1] %v410
      %s412 = smul.u32 8, %s16
      %p413 = scmp.lt.s32.totalorder %s412, 15
      %s414 = scalar_select %p413, %s412, 15
      %s415 = smul.addr %s414, 8
      %s416 = scalar_lea.vmem %s2, %s415
      // Predicated region
      $region33: #{basic_block_forward.5} parent=27 // pred_check
        %p417 = pneg %p81
      $region34: #{basic_block_forward.5} parent=27 // pred_check_branch
        %419 = sbr.rel (%p417) target = $region36
      $region35: #{basic_block_forward.5} parent=27 // pred_region
        %s420 = smul.u32 8, %s16
      $region36: #{basic_block_forward.5} parent=27 // pred_fallthru
        _
      // Predicated region
      $region37: #{basic_block_forward.5} parent=27 // pred_check
        %p421 = pneg %p102
      $region38: #{basic_block_forward.5} parent=27 // pred_check_branch
        %423 = sbr.rel (%p421) target = $region40
      $region39: #{basic_block_forward.5} parent=27 // pred_region
        _
      $region40: #{basic_block_forward.5} parent=27 // pred_fallthru
        _
      // Predicated region
      $region41: #{basic_block_forward.5} parent=27 // pred_check
        %p424 = pneg %p123
      $region42: #{basic_block_forward.5} parent=27 // pred_check_branch
        %426 = sbr.rel (%p424) target = $region44
      $region43: #{basic_block_forward.5} parent=27 // pred_region
        _
      $region44: #{basic_block_forward.5} parent=27 // pred_fallthru
        _
      // Predicated region
      $region45: #{basic_block_forward.5} parent=27 // pred_check
        %p427 = pneg %p102
      $region46: #{basic_block_forward.5} parent=27 // pred_check_branch
        %429 = sbr.rel (%p427) target = $region48
      $region47: #{basic_block_forward.5} parent=27 // pred_region
        _
      $region48: #{basic_block_forward.5} parent=27 // pred_fallthru
        _
      // Predicated region
      $region49: #{basic_block_forward.5} parent=27 // pred_check
        %p430 = pneg %p123
      $region50: #{basic_block_forward.5} parent=27 // pred_check_branch
        %432 = sbr.rel (%p430) target = $region52
      $region51: #{basic_block_forward.5} parent=27 // pred_region
        _
      $region52: #{basic_block_forward.5} parent=27 // pred_fallthru
        _
    $region28: #{basic_block_forward.5} parent=5 // pred_fallthru
      _
    %p433 = scmp.le.s32.totalorder 2, %s11
    // Predicated region
    $region53: #{basic_block_forward.5} parent=5 // pred_check
      %p434 = pneg %p433
    $region54: #{basic_block_forward.5} parent=5 // pred_check_branch
      %436 = sbr.rel (%p434) target = $region56
    $region55: #{basic_block_forward.5} parent=5 // pred_region
      %s437 = ssub.s32 %s11, 2
      // Predicated region
      $region57: #{basic_block_forward.5} parent=55 // pred_check
        %p438 = pneg %p87
      $region58: #{basic_block_forward.5} parent=55 // pred_check_branch
        %440 = sbr.rel (%p438) target = $region60
      $region59: #{basic_block_forward.5} parent=55 // pred_region
        %s441 = smul.u32 8, %s17
        %p442 = scmp.lt.s32.totalorder %s441, 15
        %s443 = scalar_select %p442, %s441, 15
        %s444 = smul.addr %s443, 8
        %s445 = scalar_lea.vmem %s2, %s444
      $region60: #{basic_block_forward.5} parent=55 // pred_fallthru
        _
    $region56: #{basic_block_forward.5} parent=5 // pred_fallthru
      _
  $region6: #{basic_block_forward.5} parent=0 // loop_footer
    %s15 = sadd.s32 1, %s11
  $region7: #{basic_block_forward.5} parent=0 // loop_footer_branch
    %10 = sbr.rel target = $region3
  $region8: #{basic_block_forward.5} parent=0 // loop_exit
    _

// kernel: basic_block_forward.9
$region0: #{basic_block_forward.9}
  #allocation0 [shape = 'u32[]', space=smem, size = 0x4, offset = 0x4, fixed_abs, tag = 'smem constant byte address 0x4 - core index']
  #allocation1 [shape = 'u32[144,128]{1,0:T(1,128)}', space=vmem, size = 0x12000, scoped, tag = 'internal scratch']
  %s0 = inlined_call_operand.vmem [shape: f32[128,128], index: 0, kind: input, shape index: {}]
  %s1 = inlined_call_operand.vmem [shape: f32[1,128], index: 1, kind: input, shape index: {}]
  %s2 = inlined_call_operand.vmem [shape: f32[1,128], index: 2, kind: input, shape index: {}]
  %s3 = inlined_call_operand.vmem [shape: f32[128,128], index: 3, kind: input, shape index: {}]
  %s4 = inlined_call_operand.vmem [shape: f32[1,128], index: 4, kind: input, shape index: {}]
  %s5 = inlined_call_operand.vmem [shape: f32[1,128], index: 5, kind: input, shape index: {}]
  %s6 = inlined_call_operand.vmem [shape: f32[128,128], index: 6, kind: output, shape index: {}]
  %s7 = sld [smem:[#allocation0]]
  $region57: #{basic_block_forward.9} parent=0
    _
  %s9 = ssub.s32 1, %s7
  %s10 = scalar_select 0, %s9, %s7
  loop: start=0, step=1, limit=4
  $region2: #{basic_block_forward.9} parent=0 // loop_pre_header
    _
  $region3: #{basic_block_forward.9} parent=0 // loop_header
    %s12 = sphi 0, %s16
    %p13 = scmp.ge.s32.totalorder %s12, 4
    %s22 = sphi 0, %s24
    %s25 = sphi 0, %s22
    %s26 = sphi 0, %s25
    %s42 = sphi 0, %s26
    %s46 = sphi 0, %s46
    %s48 = sphi 0, %s46
    %s49 = sphi 0, %s48
    %s63 = sphi 0, %s49
    %s67 = sphi 0, %s67
    %s69 = sphi 0, %s67
    %s70 = sphi 0, %s69
    %s84 = sphi 0, %s70
    %s90 = sphi 0, %s92
    %s93 = sphi 0, %s90
    %s94 = sphi 0, %s93
    %s110 = sphi 0, %s94
    %s114 = sphi 0, %s114
    %s116 = sphi 0, %s114
    %s117 = sphi 0, %s116
    %s131 = sphi 0, %s117
    %s135 = sphi 0, %s135
    %s137 = sphi 0, %s135
    %s138 = sphi 0, %s137
    %s152 = sphi 0, %s138
    %s158 = sphi 0, %s160
    %s161 = sphi 0, %s158
    %s162 = sphi 0, %s161
    %s178 = sphi 0, %s162
  $region4: #{basic_block_forward.9} parent=0 // loop_header_branch
    %15 = sbr.rel (%p13) target = $region8
  $region5: #{basic_block_forward.9} parent=0 // loop_body
    %s17 = ssub.s32 %s12, 1
    %s18 = ssub.s32 %s12, 2
    %s19 = sadd.s32 %s12, 1
    %s20 = ssub.s32 %s12, %s19
    %p21 = scmp.eq.s32.totalorder %s20, 0
    %s23 = sadd.s32 %s22, 1
    %s24 = scalar_select %p21, %s22, %s23
    %p27 = pneg %p21
    %p28 = scmp.eq.s32.totalorder %s12, 1
    %p29 = por %p27, %p28
    %p30 = scmp.ne.s32.totalorder %s22, %s25
    %p31 = scmp.eq.s32.totalorder %s12, 0
    %p32 = por %p30, %p31
    %p33 = scmp.ne.s32.totalorder %s22, %s25
    %p34 = scmp.eq.s32.totalorder %s17, 1
    %p35 = por %p33, %p34
    %p36 = scmp.ne.s32.totalorder %s25, %s26
    %p37 = scmp.eq.s32.totalorder %s17, 0
    %p38 = por %p36, %p37
    %p39 = scmp.ne.s32.totalorder %s25, %s26
    %p40 = scmp.eq.s32.totalorder %s18, 1
    %p41 = por %p39, %p40
    %p43 = scmp.ne.s32.totalorder %s26, %s42
    %p44 = scmp.eq.s32.totalorder %s18, 0
    %p45 = por %p43, %p44
    %s47 = sadd.s32 %s46, 1
    %p50 = scmp.eq.s32.totalorder %s12, 1
    %p51 = scmp.ne.s32.totalorder %s46, %s48
    %p52 = scmp.eq.s32.totalorder %s12, 0
    %p53 = por %p51, %p52
    %p54 = scmp.ne.s32.totalorder %s46, %s48
    %p55 = scmp.eq.s32.totalorder %s17, 1
    %p56 = por %p54, %p55
    %p57 = scmp.ne.s32.totalorder %s48, %s49
    %p58 = scmp.eq.s32.totalorder %s17, 0
    %p59 = por %p57, %p58
    %p60 = scmp.ne.s32.totalorder %s48, %s49
    %p61 = scmp.eq.s32.totalorder %s18, 1
    %p62 = por %p60, %p61
    %p64 = scmp.ne.s32.totalorder %s49, %s63
    %p65 = scmp.eq.s32.totalorder %s18, 0
    %p66 = por %p64, %p65
    %s68 = sadd.s32 %s67, 1
    %p71 = scmp.eq.s32.totalorder %s12, 1
    %p72 = scmp.ne.s32.totalorder %s67, %s69
    %p73 = scmp.eq.s32.totalorder %s12, 0
    %p74 = por %p72, %p73
    %p75 = scmp.ne.s32.totalorder %s67, %s69
    %p76 = scmp.eq.s32.totalorder %s17, 1
    %p77 = por %p75, %p76
    %p78 = scmp.ne.s32.totalorder %s69, %s70
    %p79 = scmp.eq.s32.totalorder %s17, 0
    %p80 = por %p78, %p79
    %p81 = scmp.ne.s32.totalorder %s69, %s70
    %p82 = scmp.eq.s32.totalorder %s18, 1
    %p83 = por %p81, %p82
    %p85 = scmp.ne.s32.totalorder %s70, %s84
    %p86 = scmp.eq.s32.totalorder %s18, 0
    %p87 = por %p85, %p86
    %s88 = ssub.s32 %s12, %s19
    %p89 = scmp.eq.s32.totalorder %s88, 0
    %s91 = sadd.s32 %s90, 1
    %s92 = scalar_select %p89, %s90, %s91
    %p95 = pneg %p89
    %p96 = scmp.eq.s32.totalorder %s12, 1
    %p97 = por %p95, %p96
    %p98 = scmp.ne.s32.totalorder %s90, %s93
    %p99 = scmp.eq.s32.totalorder %s12, 0
    %p100 = por %p98, %p99
    %p101 = scmp.ne.s32.totalorder %s90, %s93
    %p102 = scmp.eq.s32.totalorder %s17, 1
    %p103 = por %p101, %p102
    %p104 = scmp.ne.s32.totalorder %s93, %s94
    %p105 = scmp.eq.s32.totalorder %s17, 0
    %p106 = por %p104, %p105
    %p107 = scmp.ne.s32.totalorder %s93, %s94
    %p108 = scmp.eq.s32.totalorder %s18, 1
    %p109 = por %p107, %p108
    %p111 = scmp.ne.s32.totalorder %s94, %s110
    %p112 = scmp.eq.s32.totalorder %s18, 0
    %p113 = por %p111, %p112
    %s115 = sadd.s32 %s114, 1
    %p118 = scmp.eq.s32.totalorder %s12, 1
    %p119 = scmp.ne.s32.totalorder %s114, %s116
    %p120 = scmp.eq.s32.totalorder %s12, 0
    %p121 = por %p119, %p120
    %p122 = scmp.ne.s32.totalorder %s114, %s116
    %p123 = scmp.eq.s32.totalorder %s17, 1
    %p124 = por %p122, %p123
    %p125 = scmp.ne.s32.totalorder %s116, %s117
    %p126 = scmp.eq.s32.totalorder %s17, 0
    %p127 = por %p125, %p126
    %p128 = scmp.ne.s32.totalorder %s116, %s117
    %p129 = scmp.eq.s32.totalorder %s18, 1
    %p130 = por %p128, %p129
    %p132 = scmp.ne.s32.totalorder %s117, %s131
    %p133 = scmp.eq.s32.totalorder %s18, 0
    %p134 = por %p132, %p133
    %s136 = sadd.s32 %s135, 1
    %p139 = scmp.eq.s32.totalorder %s12, 1
    %p140 = scmp.ne.s32.totalorder %s135, %s137
    %p141 = scmp.eq.s32.totalorder %s12, 0
    %p142 = por %p140, %p141
    %p143 = scmp.ne.s32.totalorder %s135, %s137
    %p144 = scmp.eq.s32.totalorder %s17, 1
    %p145 = por %p143, %p144
    %p146 = scmp.ne.s32.totalorder %s137, %s138
    %p147 = scmp.eq.s32.totalorder %s17, 0
    %p148 = por %p146, %p147
    %p149 = scmp.ne.s32.totalorder %s137, %s138
    %p150 = scmp.eq.s32.totalorder %s18, 1
    %p151 = por %p149, %p150
    %p153 = scmp.ne.s32.totalorder %s138, %s152
    %p154 = scmp.eq.s32.totalorder %s18, 0
    %p155 = por %p153, %p154
    %s156 = ssub.s32 %s12, %s19
    %p157 = scmp.eq.s32.totalorder %s156, 0
    %s159 = sadd.s32 %s158, 1
    %s160 = scalar_select %p157, %s158, %s159
    %p163 = pneg %p157
    %p164 = scmp.eq.s32.totalorder %s12, 1
    %p165 = por %p163, %p164
    %p166 = scmp.ne.s32.totalorder %s158, %s161
    %p167 = scmp.eq.s32.totalorder %s12, 0
    %p168 = por %p166, %p167
    %p169 = scmp.ne.s32.totalorder %s158, %s161
    %p170 = scmp.eq.s32.totalorder %s17, 1
    %p171 = por %p169, %p170
    %p172 = scmp.ne.s32.totalorder %s161, %s162
    %p173 = scmp.eq.s32.totalorder %s17, 0
    %p174 = por %p172, %p173
    %p175 = scmp.ne.s32.totalorder %s161, %s162
    %p176 = scmp.eq.s32.totalorder %s18, 1
    %p177 = por %p175, %p176
    %p179 = scmp.ne.s32.totalorder %s162, %s178
    %p180 = scmp.eq.s32.totalorder %s18, 0
    %p181 = por %p179, %p180
    %p182 = scmp.le.s32.totalorder 1, %s12
    %p183 = scmp.lt.s32.totalorder %s12, 3
    %p184 = pnand %p182, %p183
    %p185 = pneg %p184
    // Predicated region
    $region9: #{basic_block_forward.9} parent=5 // pred_check
      _
    $region10: #{basic_block_forward.9} parent=5 // pred_check_branch
      %187 = sbr.rel (%p184) target = $region12
    $region11: #{basic_block_forward.9} parent=5 // pred_region
      %s188 = ssub.s32 %s12, 1
      // Predicated region
      $region13: #{basic_block_forward.9} parent=11 // pred_check
        %p189 = pneg %p59
      $region14: #{basic_block_forward.9} parent=11 // pred_check_branch
        %191 = sbr.rel (%p189) target = $region16
      $region15: #{basic_block_forward.9} parent=11 // pred_region
        _
      $region16: #{basic_block_forward.9} parent=11 // pred_fallthru
        _
      // Predicated region
      $region17: #{basic_block_forward.9} parent=11 // pred_check
        %p192 = pneg %p80
      $region18: #{basic_block_forward.9} parent=11 // pred_check_branch
        %194 = sbr.rel (%p192) target = $region20
      $region19: #{basic_block_forward.9} parent=11 // pred_region
        _
      $region20: #{basic_block_forward.9} parent=11 // pred_fallthru
        _
      // Predicated region
      $region21: #{basic_block_forward.9} parent=11 // pred_check
        %p195 = pneg %p127
      $region22: #{basic_block_forward.9} parent=11 // pred_check_branch
        %197 = sbr.rel (%p195) target = $region24
      $region23: #{basic_block_forward.9} parent=11 // pred_region
        _
      $region24: #{basic_block_forward.9} parent=11 // pred_fallthru
        _
      // Predicated region
      $region25: #{basic_block_forward.9} parent=11 // pred_check
        %p198 = pneg %p148
      $region26: #{basic_block_forward.9} parent=11 // pred_check_branch
        %200 = sbr.rel (%p198) target = $region28
      $region27: #{basic_block_forward.9} parent=11 // pred_region
        _
      $region28: #{basic_block_forward.9} parent=11 // pred_fallthru
        _
    $region12: #{basic_block_forward.9} parent=5 // pred_fallthru
      _
    %p201 = scmp.lt.s32.totalorder %s12, 2
    // Predicated region
    $region29: #{basic_block_forward.9} parent=5 // pred_check
      %p202 = pneg %p201
    $region30: #{basic_block_forward.9} parent=5 // pred_check_branch
      %204 = sbr.rel (%p202) target = $region32
    $region31: #{basic_block_forward.9} parent=5 // pred_region
      // Predicated region
      $region33: #{basic_block_forward.9} parent=31 // pred_check
        %p205 = pneg %p32
      $region34: #{basic_block_forward.9} parent=31 // pred_check_branch
        %207 = sbr.rel (%p205) target = $region36
      $region35: #{basic_block_forward.9} parent=31 // pred_region
        %s208 = smul.u32 8, %s12
        %p209 = scmp.lt.s32.totalorder %s208, 15
        %s210 = scalar_select %p209, %s208, 15
        %s211 = smul.addr %s210, 8
        %s212 = scalar_lea.vmem %s0, %s211
        %s213 = smul.u32 8, %s12
      $region36: #{basic_block_forward.9} parent=31 // pred_fallthru
        _
      // Predicated region
      $region37: #{basic_block_forward.9} parent=31 // pred_check
        %p214 = pneg %p100
      $region38: #{basic_block_forward.9} parent=31 // pred_check_branch
        %216 = sbr.rel (%p214) target = $region40
      $region39: #{basic_block_forward.9} parent=31 // pred_region
        %s217 = smul.u32 8, %s12
        %p218 = scmp.lt.s32.totalorder %s217, 15
        %s219 = scalar_select %p218, %s217, 15
        %s220 = smul.addr %s219, 8
        %s221 = scalar_lea.vmem %s3, %s220
        %s222 = smul.u32 8, %s12
      $region40: #{basic_block_forward.9} parent=31 // pred_fallthru
        _
    $region32: #{basic_block_forward.9} parent=5 // pred_fallthru
      _
    %p223 = scmp.le.s32.totalorder 1, %s12
    %p224 = scmp.lt.s32.totalorder %s12, 3
    %p225 = pnand %p223, %p224
    %p226 = pneg %p225
    // Predicated region
    $region41: #{basic_block_forward.9} parent=5 // pred_check
      _
    $region42: #{basic_block_forward.9} parent=5 // pred_check_branch
      %228 = sbr.rel (%p225) target = $region44
    $region43: #{basic_block_forward.9} parent=5 // pred_region
      %s229 = ssub.s32 %s12, 1
      %s230 = smul.u32 8, %s17
      %p231 = scmp.lt.s32.totalorder %s230, 15
      %s232 = scalar_select %p231, %s230, 15
      %s233 = smul.addr %s232, 8
      %s234 = scalar_lea.vmem %s0, %s233
      %p235 = pneg %p38
      %p236 = pneg %p35
      %p237 = pneg %p59
      %p238 = pneg %p56
      %p239 = pneg %p80
      %p240 = pneg %p77
      %s241 = smul.u32 8, %s17
      %p242 = scmp.lt.s32.totalorder %s241, 15
      %s243 = scalar_select %p242, %s241, 15
      %s244 = smul.addr %s243, 8
      %s245 = scalar_lea.vmem %s3, %s244
      %p246 = pneg %p106
      %p247 = pneg %p103
      %p248 = pneg %p127
      %p249 = pneg %p124
      %p250 = pneg %p148
      %p251 = pneg %p145
      %p252 = pneg %p174
      %p253 = pneg %p171
      %s254 = smul.u32 8, %s17
      %p255 = scmp.lt.s32.totalorder %s254, 15
      %s256 = scalar_select %p255, %s254, 15
      %s257 = smul.addr %s256, 8
      %s258 = scalar_lea.vmem %s6, %s257
      %s259 = smul.u32 8, %s17
      %p260 = scmp.lt.s32.totalorder %s259, 15
      %s261 = scalar_select %p260, %s259, 15
      %s262 = smul.addr %s261, 8
      %s263 = scalar_lea.vmem %s0, %s262
      %s264 = smul.u32 8, %s17
      %s265 = smul.u32 8, %s17
      %p266 = scmp.lt.s32.totalorder %s265, 15
      %s267 = scalar_select %p266, %s265, 15
      %s268 = smul.addr %s267, 8
      %s269 = scalar_lea.vmem %s3, %s268
      %s270 = smul.u32 8, %s17
      %s271 = smul.u32 8, %s17
      %p272 = scmp.lt.s32.totalorder %s271, 15
      %s273 = scalar_select %p272, %s271, 15
      %s274 = smul.addr %s273, 8
      %s275 = scalar_lea.vmem %s6, %s274
      %s276 = smul.u32 8, %s17
      %v277 = vld [vmem:[%s263] sm:$0xff]
      %v278 = vld [vmem:[%s263 + $0x8] sm:$0xff]
      %v279 = vld [vmem:[%s263 + $0x10] sm:$0xff]
      %v280 = vld [vmem:[%s263 + $0x18] sm:$0xff]
      %v281 = vld [vmem:[%s263 + $0x20] sm:$0xff]
      %v282 = vld [vmem:[%s263 + $0x28] sm:$0xff]
      %v283 = vld [vmem:[%s263 + $0x30] sm:$0xff]
      %v284 = vld [vmem:[%s263 + $0x38] sm:$0xff]
      %v285 = vld [vmem:[%s1] sm:$0x1]
      %v287 = vlaneseq
      %v288 = vshrl.u32 %v287, 7
      %v289 = vsub.s32 0, %v288
      %v290 = vrot.slane %v285, %v289
      %v292 = vmul.f32 %v277, %v290
      %v293 = vmul.f32 %v278, %v290
      %v294 = vmul.f32 %v279, %v290
      %v295 = vmul.f32 %v280, %v290
      %v296 = vmul.f32 %v281, %v290
      %v297 = vmul.f32 %v282, %v290
      %v298 = vmul.f32 %v283, %v290
      %v299 = vmul.f32 %v284, %v290
      %v300 = vld [vmem:[%s2] sm:$0x1]
      %v302 = vlaneseq
      %v303 = vshrl.u32 %v302, 7
      %v304 = vsub.s32 0, %v303
      %v305 = vrot.slane %v300, %v304
      %v307 = vadd.f32 %v292, %v305
      %v308 = vadd.f32 %v293, %v305
      %v309 = vadd.f32 %v294, %v305
      %v310 = vadd.f32 %v295, %v305
      %v311 = vadd.f32 %v296, %v305
      %v312 = vadd.f32 %v297, %v305
      %v313 = vadd.f32 %v298, %v305
      %v314 = vadd.f32 %v299, %v305
      %v315 = vld [vmem:[%s269] sm:$0xff]
      %v316 = vld [vmem:[%s269 + $0x8] sm:$0xff]
      %v317 = vld [vmem:[%s269 + $0x10] sm:$0xff]
      %v318 = vld [vmem:[%s269 + $0x18] sm:$0xff]
      %v319 = vld [vmem:[%s269 + $0x20] sm:$0xff]
      %v320 = vld [vmem:[%s269 + $0x28] sm:$0xff]
      %v321 = vld [vmem:[%s269 + $0x30] sm:$0xff]
      %v322 = vld [vmem:[%s269 + $0x38] sm:$0xff]
      %v323 = vld [vmem:[%s4] sm:$0x1]
      %v325 = vlaneseq
      %v326 = vshrl.u32 %v325, 7
      %v327 = vsub.s32 0, %v326
      %v328 = vrot.slane %v323, %v327
      %v330 = vmul.f32 %v315, %v328
      %v331 = vmul.f32 %v316, %v328
      %v332 = vmul.f32 %v317, %v328
      %v333 = vmul.f32 %v318, %v328
      %v334 = vmul.f32 %v319, %v328
      %v335 = vmul.f32 %v320, %v328
      %v336 = vmul.f32 %v321, %v328
      %v337 = vmul.f32 %v322, %v328
      %v338 = vld [vmem:[%s5] sm:$0x1]
      %v340 = vlaneseq
      %v341 = vshrl.u32 %v340, 7
      %v342 = vsub.s32 0, %v341
      %v343 = vrot.slane %v338, %v342
      %v345 = vadd.f32 %v330, %v343
      %v346 = vadd.f32 %v331, %v343
      %v347 = vadd.f32 %v332, %v343
      %v348 = vadd.f32 %v333, %v343
      %v349 = vadd.f32 %v334, %v343
      %v350 = vadd.f32 %v335, %v343
      %v351 = vadd.f32 %v336, %v343
      %v352 = vadd.f32 %v337, %v343
      %v353 = vadd.f32 %v307, %v345
      %v354 = vadd.f32 %v308, %v346
      %v355 = vadd.f32 %v309, %v347
      %v356 = vadd.f32 %v310, %v348
      %v357 = vadd.f32 %v311, %v349
      %v358 = vadd.f32 %v312, %v350
      %v359 = vadd.f32 %v313, %v351
      %v360 = vadd.f32 %v314, %v352
      %v361 = vmax.f32 %v353, 0.0
      %v362 = vmax.f32 %v354, 0.0
      %v363 = vmax.f32 %v355, 0.0
      %v364 = vmax.f32 %v356, 0.0
      %v365 = vmax.f32 %v357, 0.0
      %v366 = vmax.f32 %v358, 0.0
      %v367 = vmax.f32 %v359, 0.0
      %v368 = vmax.f32 %v360, 0.0
      %369 = vst [vmem:[%s275] sm:$0xff] %v361
      %370 = vst [vmem:[%s275 + $0x8] sm:$0xff] %v362
      %371 = vst [vmem:[%s275 + $0x10] sm:$0xff] %v363
      %372 = vst [vmem:[%s275 + $0x18] sm:$0xff] %v364
      %373 = vst [vmem:[%s275 + $0x20] sm:$0xff] %v365
      %374 = vst [vmem:[%s275 + $0x28] sm:$0xff] %v366
      %375 = vst [vmem:[%s275 + $0x30] sm:$0xff] %v367
      %376 = vst [vmem:[%s275 + $0x38] sm:$0xff] %v368
      %s377 = smul.u32 8, %s17
      %p378 = scmp.lt.s32.totalorder %s377, 15
      %s379 = scalar_select %p378, %s377, 15
      %s380 = smul.addr %s379, 8
      %s381 = scalar_lea.vmem %s6, %s380
      // Predicated region
      $region45: #{basic_block_forward.9} parent=43 // pred_check
        %p382 = pneg %p171
      $region46: #{basic_block_forward.9} parent=43 // pred_check_branch
        %384 = sbr.rel (%p382) target = $region48
      $region47: #{basic_block_forward.9} parent=43 // pred_region
        %s385 = smul.u32 8, %s17
      $region48: #{basic_block_forward.9} parent=43 // pred_fallthru
        _
    $region44: #{basic_block_forward.9} parent=5 // pred_fallthru
      _
    %p386 = scmp.le.s32.totalorder 2, %s12
    // Predicated region
    $region49: #{basic_block_forward.9} parent=5 // pred_check
      %p387 = pneg %p386
    $region50: #{basic_block_forward.9} parent=5 // pred_check_branch
      %389 = sbr.rel (%p387) target = $region52
    $region51: #{basic_block_forward.9} parent=5 // pred_region
      %s390 = ssub.s32 %s12, 2
      // Predicated region
      $region53: #{basic_block_forward.9} parent=51 // pred_check
        %p391 = pneg %p177
      $region54: #{basic_block_forward.9} parent=51 // pred_check_branch
        %393 = sbr.rel (%p391) target = $region56
      $region55: #{basic_block_forward.9} parent=51 // pred_region
        %s394 = smul.u32 8, %s18
        %p395 = scmp.lt.s32.totalorder %s394, 15
        %s396 = scalar_select %p395, %s394, 15
        %s397 = smul.addr %s396, 8
        %s398 = scalar_lea.vmem %s6, %s397
      $region56: #{basic_block_forward.9} parent=51 // pred_fallthru
        _
    $region52: #{basic_block_forward.9} parent=5 // pred_fallthru
      _
  $region6: #{basic_block_forward.9} parent=0 // loop_footer
    %s16 = sadd.s32 1, %s12
  $region7: #{basic_block_forward.9} parent=0 // loop_footer_branch
    %11 = sbr.rel target = $region3
  $region8: #{basic_block_forward.9} parent=0 // loop_exit
    _

</llo_original>
